<compile_context>
chip_gen: v7x
topology: tpu7x:2x2x1
jax: 0.10.0
libtpu: 0.0.40
codegen_flags: <defaults>
</compile_context>

<pallas_src>
import functools

import jax
import jax.numpy as jnp
from jax.experimental import pallas as pl
from jax.experimental.pallas import tpu as pltpu

LN_EPS = 1e-5


def _round_up(n: int, m: int) -> int:
    return ((n + m - 1) // m) * m


def _layernorm_fused(x, gamma, beta, n_real):
    """LayerNorm over the last dim with fused single-pass statistics.

    x is f32 with zeros in its padded lanes, so sums over the padded width equal
    sums over the real width; divide by the real width n_real. Padded lanes of
    gamma/beta are zero, so the output's padded lanes stay exactly zero.
    """
    s = jnp.sum(x, axis=-1, keepdims=True)
    ss = jnp.sum(x * x, axis=-1, keepdims=True)
    inv_n = 1.0 / float(n_real)
    mean = s * inv_n
    var = ss * inv_n - mean * mean
    xhat = (x - mean) * jax.lax.rsqrt(var + LN_EPS)
    return xhat * gamma + beta


def resnet_prediction_kernel(
    x_ref,          # (TB, in_pad)      bf16
    w_in_ref,       # (in_pad, d_pad)   bf16
    b_in_ref,       # (1, d_pad)        f32
    blk_g_ref,      # (L, 1, d_pad)     f32  layernorm gamma per block
    blk_b_ref,      # (L, 1, d_pad)     f32  layernorm beta per block
    blk_w_ref,      # (L, d_pad, d_pad) bf16 linear weight per block
    blk_bias_ref,   # (L, 1, d_pad)     f32  linear bias per block
    w2_ref,         # (d_pad, dh_pad)   bf16
    b2_ref,         # (1, dh_pad)       f32
    g2_ref,         # (1, dh_pad)       f32
    beta2_ref,      # (1, dh_pad)       f32
    wh_ref,         # (dh_pad, 128)     bf16  (real head weight in column 0)
    bh_ref,         # (1, 128)          f32
    out_ref,        # (TB, 128)         f32
    *,
    n_layers: int,
    d_real: int,
    dh_real: int,
):
    bf16 = jnp.bfloat16

    # input_layer: Linear(input_dim, d) — bf16 MXU matmul, f32 accumulation.
    h = jnp.dot(x_ref[...], w_in_ref[...],
                preferred_element_type=jnp.float32) + b_in_ref[...]

    # ResNet blocks: x = x + dropout(relu(Linear(LayerNorm(x)))); dropout = identity.
    # n_layers is small -> unrolled Python loop (keeps LLO scheduler visibility).
    for layer in range(n_layers):
        z = _layernorm_fused(h, blk_g_ref[layer], blk_b_ref[layer], d_real)
        z = jnp.dot(z.astype(bf16), blk_w_ref[layer],
                    preferred_element_type=jnp.float32) + blk_bias_ref[layer]
        h = h + jnp.maximum(z, 0.0)   # relu + residual, accumulator stays f32

    # head path: dropout(relu(LayerNorm(Linear(x)))) -> Linear(dh, 1), lane-dense padded.
    z = jnp.dot(h.astype(bf16), w2_ref[...],
                preferred_element_type=jnp.float32) + b2_ref[...]
    z = _layernorm_fused(z, g2_ref[...], beta2_ref[...], dh_real)
    z = jnp.maximum(z, 0.0)
    out = jnp.dot(z.astype(bf16), wh_ref[...],
                  preferred_element_type=jnp.float32) + bh_ref[...]
    out_ref[...] = out


def _pad2(a, rows, cols):
    return jnp.pad(a, ((0, rows - a.shape[0]), (0, cols - a.shape[1])))


def resnet_prediction_forward(cat_feats, num_feats, params, n_layers):
    # Glue: concat along feature dim (dim=1 in PyTorch).
    x = jnp.concatenate([cat_feats, num_feats], axis=1).astype(jnp.float32)
    B, in_dim = x.shape
    d = params["w_in"].shape[1]
    dh = params["w2"].shape[1]

    # Lane-align all feature dims; lane-dense head output (128 wide, col 0 real).
    in_pad = _round_up(in_dim, 128)
    d_pad = _round_up(d, 128)
    dh_pad = _round_up(dh, 128)
    out_pad = 128

    # Batch tile: 128 for production batches, rounded-to-sublane full batch when tiny.
    TB = min(128, _round_up(B, 8))
    B_pad = _round_up(B, TB)

    bf16 = jnp.bfloat16
    x_p = jnp.pad(x, ((0, B_pad - B), (0, in_pad - in_dim))).astype(bf16)

    w_in = _pad2(params["w_in"], in_pad, d_pad).astype(bf16)
    b_in = _pad2(params["b_in"], 1, d_pad)
    blk_g = jnp.pad(params["blk_gamma"], ((0, 0), (0, 0), (0, d_pad - d)))
    blk_b = jnp.pad(params["blk_beta"], ((0, 0), (0, 0), (0, d_pad - d)))
    blk_w = jnp.pad(params["blk_w"], ((0, 0), (0, d_pad - d), (0, d_pad - d))).astype(bf16)
    blk_bias = jnp.pad(params["blk_bias"], ((0, 0), (0, 0), (0, d_pad - d)))
    w2 = _pad2(params["w2"], d_pad, dh_pad).astype(bf16)
    b2 = _pad2(params["b2"], 1, dh_pad)
    g2 = _pad2(params["g2"], 1, dh_pad)
    beta2 = _pad2(params["beta2"], 1, dh_pad)
    wh = _pad2(params["wh"], dh_pad, out_pad).astype(bf16)
    bh = _pad2(params["bh"], 1, out_pad)

    grid = (B_pad // TB,)

    def const_map(rank):
        return lambda i, _r=rank: (0,) * _r

    in_specs = [
        pl.BlockSpec((TB, in_pad), lambda i: (i, 0)),             # x: batch-tiled
        pl.BlockSpec(w_in.shape, const_map(2)),                   # weights: VMEM-resident
        pl.BlockSpec(b_in.shape, const_map(2)),
        pl.BlockSpec(blk_g.shape, const_map(3)),
        pl.BlockSpec(blk_b.shape, const_map(3)),
        pl.BlockSpec(blk_w.shape, const_map(3)),
        pl.BlockSpec(blk_bias.shape, const_map(3)),
        pl.BlockSpec(w2.shape, const_map(2)),
        pl.BlockSpec(b2.shape, const_map(2)),
        pl.BlockSpec(g2.shape, const_map(2)),
        pl.BlockSpec(beta2.shape, const_map(2)),
        pl.BlockSpec(wh.shape, const_map(2)),
        pl.BlockSpec(bh.shape, const_map(2)),
    ]
    out_specs = pl.BlockSpec((TB, out_pad), lambda i: (i, 0))

    operands = (x_p, w_in, b_in, blk_g, blk_b, blk_w, blk_bias,
                w2, b2, g2, beta2, wh, bh)

    flops = 2 * B_pad * (in_pad * d_pad + n_layers * d_pad * d_pad
                         + d_pad * dh_pad + dh_pad * out_pad)
    bytes_accessed = int(sum(a.size * a.dtype.itemsize for a in operands)
                         + B_pad * out_pad * 4)
    cost = pl.CostEstimate(flops=flops,
                           transcendentals=B_pad * (n_layers + 1),
                           bytes_accessed=bytes_accessed)

    kernel = functools.partial(resnet_prediction_kernel,
                               n_layers=n_layers, d_real=d, dh_real=dh)

    out = pl.pallas_call(
        kernel,
        out_shape=jax.ShapeDtypeStruct((B_pad, out_pad), jnp.float32),
        grid=grid,
        in_specs=in_specs,
        out_specs=out_specs,
        compiler_params=pltpu.CompilerParams(dimension_semantics=("parallel",)),
        cost_estimate=cost,
    )(*operands)

    # Lane-dense output: real result lives in column 0; drop batch padding (== squeeze(-1)).
    return out[:B, 0]


def _ref_forward(cat_feats, num_feats, params, n_layers):
    """Pure-JAX reference mirroring the kernel's precision (bf16 MXU, f32 accum/LN)."""
    bf16 = jnp.bfloat16

    def dot(a, w):
        return jnp.dot(a.astype(bf16), w.astype(bf16),
                       preferred_element_type=jnp.float32)

    x = jnp.concatenate([cat_feats, num_feats], axis=1).astype(jnp.float32)
    h = dot(x, params["w_in"]) + params["b_in"]
    for layer in range(n_layers):
        z = _layernorm_fused(h, params["blk_gamma"][layer],
                             params["blk_beta"][layer], h.shape[-1])
        z = dot(z, params["blk_w"][layer]) + params["blk_bias"][layer]
        h = h + jnp.maximum(z, 0.0)
    z = dot(h, params["w2"]) + params["b2"]
    z = _layernorm_fused(z, params["g2"], params["beta2"], z.shape[-1])
    z = jnp.maximum(z, 0.0)
    out = dot(z, params["wh"]) + params["bh"]
    return out[:, 0]


def init_params(key, input_dim, d, d_hidden, n_layers):
    """Deterministic init mimicking nn.Linear default (uniform +/- 1/sqrt(fan_in))."""
    keys = jax.random.split(key, 6 + 2 * n_layers)

    def lin(k, fan_in, fan_out):
        bound = 1.0 / jnp.sqrt(fan_in)
        kw, kb = jax.random.split(k)
        w = jax.random.uniform(kw, (fan_in, fan_out), jnp.float32, -bound, bound)
        b = jax.random.uniform(kb, (1, fan_out), jnp.float32, -bound, bound)
        return w, b

    w_in, b_in = lin(keys[0], input_dim, d)

    blk_w, blk_bias = [], []
    for i in range(n_layers):
        w, b = lin(keys[1 + i], d, d)
        blk_w.append(w)
        blk_bias.append(b)
    blk_w = jnp.stack(blk_w)                              # (L, d, d)
    blk_bias = jnp.stack(blk_bias)                        # (L, 1, d)
    blk_gamma = jnp.ones((n_layers, 1, d), jnp.float32)   # LayerNorm init
    blk_beta = jnp.zeros((n_layers, 1, d), jnp.float32)

    w2, b2 = lin(keys[1 + n_layers], d, d_hidden)
    g2 = jnp.ones((1, d_hidden), jnp.float32)
    beta2 = jnp.zeros((1, d_hidden), jnp.float32)
    wh, bh = lin(keys[2 + n_layers], d_hidden, 1)

    return dict(
        w_in=w_in, b_in=b_in,
        blk_gamma=blk_gamma, blk_beta=blk_beta,
        blk_w=blk_w, blk_bias=blk_bias,
        w2=w2, b2=b2, g2=g2, beta2=beta2,
        wh=wh, bh=bh,
    )


if __name__ == "__main__":
    # Small config: input_dim = 4 (cat) + 4 (num) = 8, d = 32, hidden factor = 2,
    # n_layers = 2, batch = 8.
    batch = 8
    n_cat, n_num = 4, 4
    input_dim = n_cat + n_num
    d = 32
    d_hidden_factor = 2.0
    d_hidden = int(d * d_hidden_factor)
    n_layers = 2

    key = jax.random.PRNGKey(0)
    k_cat, k_num, k_par = jax.random.split(key, 3)
    categorical_features = jax.random.normal(k_cat, (batch, n_cat), jnp.float32)
    numerical_features = jax.random.normal(k_num, (batch, n_num), jnp.float32)
    params = init_params(k_par, input_dim, d, d_hidden, n_layers)

    out = resnet_prediction_forward(categorical_features, numerical_features, params, n_layers)
    out = jax.block_until_ready(out)

    ref = _ref_forward(categorical_features, numerical_features, params, n_layers)
    assert out.shape == (batch,)
    assert jnp.allclose(out, ref, atol=1e-3, rtol=1e-3), (out, ref)

    # TODO(synk): training-mode dropout (RNG mask) and the batchnorm config branch are
    # not implemented; this kernel matches eval-mode layernorm/relu semantics.
    print("KERNEL_OK")
</pallas_src>

<mosaic_0001>
module attributes {stable_mosaic.version = 11 : i64} {
  func.func @resnet_prediction_kernel(%arg0: i32, %arg1: memref<8x128xbf16, #tpu.memory_space<vmem>>, %arg2: memref<128x128xbf16, #tpu.memory_space<vmem>>, %arg3: memref<1x128xf32, #tpu.memory_space<vmem>>, %arg4: memref<2x1x128xf32, #tpu.memory_space<vmem>>, %arg5: memref<2x1x128xf32, #tpu.memory_space<vmem>>, %arg6: memref<2x128x128xbf16, #tpu.memory_space<vmem>>, %arg7: memref<2x1x128xf32, #tpu.memory_space<vmem>>, %arg8: memref<128x128xbf16, #tpu.memory_space<vmem>>, %arg9: memref<1x128xf32, #tpu.memory_space<vmem>>, %arg10: memref<1x128xf32, #tpu.memory_space<vmem>>, %arg11: memref<1x128xf32, #tpu.memory_space<vmem>>, %arg12: memref<128x128xbf16, #tpu.memory_space<vmem>>, %arg13: memref<1x128xf32, #tpu.memory_space<vmem>>, %arg14: memref<8x128xf32, #tpu.memory_space<vmem>>) attributes {dimension_semantics = [#tpu.dimension_semantics<parallel>], iteration_bounds = array<i64: 1>, scalar_prefetch = 0 : i64, scratch_operands = 0 : i64, tpu.core_type = #tpu.core_type<tc>, window_params = [{transform_indices = @transform_0, window_bounds = array<i64: 8, 128>}, {pipeline_mode = #tpu.pipeline_mode<synchronous>, transform_indices = @transform_1, window_bounds = array<i64: 128, 128>}, {pipeline_mode = #tpu.pipeline_mode<synchronous>, transform_indices = @transform_2, window_bounds = array<i64: 1, 128>}, {pipeline_mode = #tpu.pipeline_mode<synchronous>, transform_indices = @transform_3, window_bounds = array<i64: 2, 1, 128>}, {pipeline_mode = #tpu.pipeline_mode<synchronous>, transform_indices = @transform_4, window_bounds = array<i64: 2, 1, 128>}, {pipeline_mode = #tpu.pipeline_mode<synchronous>, transform_indices = @transform_5, window_bounds = array<i64: 2, 128, 128>}, {pipeline_mode = #tpu.pipeline_mode<synchronous>, transform_indices = @transform_6, window_bounds = array<i64: 2, 1, 128>}, {pipeline_mode = #tpu.pipeline_mode<synchronous>, transform_indices = @transform_7, window_bounds = array<i64: 128, 128>}, {pipeline_mode = #tpu.pipeline_mode<synchronous>, transform_indices = @transform_8, window_bounds = array<i64: 1, 128>}, {pipeline_mode = #tpu.pipeline_mode<synchronous>, transform_indices = @transform_9, window_bounds = array<i64: 1, 128>}, {pipeline_mode = #tpu.pipeline_mode<synchronous>, transform_indices = @transform_10, window_bounds = array<i64: 1, 128>}, {pipeline_mode = #tpu.pipeline_mode<synchronous>, transform_indices = @transform_11, window_bounds = array<i64: 128, 128>}, {pipeline_mode = #tpu.pipeline_mode<synchronous>, transform_indices = @transform_12, window_bounds = array<i64: 1, 128>}, {transform_indices = @transform_13, window_bounds = array<i64: 8, 128>}]} {
    %c0 = arith.constant 0 : index
    %c0_0 = arith.constant 0 : index
    %0 = vector.load %arg1[%c0, %c0_0] : memref<8x128xbf16, #tpu.memory_space<vmem>>, vector<8x128xbf16>
    %c0_1 = arith.constant 0 : index
    %c0_2 = arith.constant 0 : index
    %1 = vector.load %arg2[%c0_1, %c0_2] : memref<128x128xbf16, #tpu.memory_space<vmem>>, vector<128x128xbf16>
    %cst = arith.constant dense<0.000000e+00> : vector<8x128xf32>
    %2 = tpu.matmul %0, %1, %cst {dimension_numbers = #tpu.dot_dimension_numbers<[1], [0], [0], [1], [0, 0, 1, 1], [], []>} : vector<8x128xbf16>, vector<128x128xbf16>, vector<8x128xf32> -> vector<8x128xf32>
    %c0_3 = arith.constant 0 : index
    %c0_4 = arith.constant 0 : index
    %3 = vector.load %arg3[%c0_3, %c0_4] : memref<1x128xf32, #tpu.memory_space<vmem>>, vector<1x128xf32>
    %4 = vector.broadcast %3 : vector<1x128xf32> to vector<8x128xf32>
    %5 = arith.addf %2, %4 : vector<8x128xf32>
    %c0_5 = arith.constant 0 : index
    %c0_6 = arith.constant 0 : index
    %c0_7 = arith.constant 0 : index
    %6 = vector.load %arg4[%c0_5, %c0_6, %c0_7] : memref<2x1x128xf32, #tpu.memory_space<vmem>>, vector<1x1x128xf32>
    %7 = vector.shape_cast %6 : vector<1x1x128xf32> to vector<1x128xf32>
    %c0_8 = arith.constant 0 : index
    %c0_9 = arith.constant 0 : index
    %c0_10 = arith.constant 0 : index
    %8 = vector.load %arg5[%c0_8, %c0_9, %c0_10] : memref<2x1x128xf32, #tpu.memory_space<vmem>>, vector<1x1x128xf32>
    %9 = vector.shape_cast %8 : vector<1x1x128xf32> to vector<1x128xf32>
    %cst_11 = arith.constant dense<0.000000e+00> : vector<8xf32>
    %10 = vector.multi_reduction <add>, %5, %cst_11 [1] : vector<8x128xf32> to vector<8xf32>
    %11 = vector.shape_cast %10 : vector<8xf32> to vector<8x1xf32>
    %12 = arith.mulf %5, %5 : vector<8x128xf32>
    %cst_12 = arith.constant dense<0.000000e+00> : vector<8xf32>
    %13 = vector.multi_reduction <add>, %12, %cst_12 [1] : vector<8x128xf32> to vector<8xf32>
    %14 = vector.shape_cast %13 : vector<8xf32> to vector<8x1xf32>
    %cst_13 = arith.constant 3.125000e-02 : f32
    %15 = vector.broadcast %cst_13 : f32 to vector<8x1xf32>
    %16 = arith.mulf %11, %15 : vector<8x1xf32>
    %cst_14 = arith.constant 3.125000e-02 : f32
    %17 = vector.broadcast %cst_14 : f32 to vector<8x1xf32>
    %18 = arith.mulf %14, %17 : vector<8x1xf32>
    %19 = arith.mulf %16, %16 : vector<8x1xf32>
    %20 = arith.subf %18, %19 : vector<8x1xf32>
    %21 = vector.broadcast %16 : vector<8x1xf32> to vector<8x128xf32>
    %22 = arith.subf %5, %21 : vector<8x128xf32>
    %cst_15 = arith.constant 9.99999974E-6 : f32
    %23 = vector.broadcast %cst_15 : f32 to vector<8x1xf32>
    %24 = arith.addf %20, %23 : vector<8x1xf32>
    %25 = math.rsqrt %24 : vector<8x1xf32>
    %26 = vector.broadcast %25 : vector<8x1xf32> to vector<8x128xf32>
    %27 = arith.mulf %22, %26 : vector<8x128xf32>
    %28 = vector.broadcast %7 : vector<1x128xf32> to vector<8x128xf32>
    %29 = arith.mulf %27, %28 : vector<8x128xf32>
    %30 = vector.broadcast %9 : vector<1x128xf32> to vector<8x128xf32>
    %31 = arith.addf %29, %30 : vector<8x128xf32>
    %32 = arith.truncf %31 : vector<8x128xf32> to vector<8x128xbf16>
    %c0_16 = arith.constant 0 : index
    %c0_17 = arith.constant 0 : index
    %c0_18 = arith.constant 0 : index
    %33 = vector.load %arg6[%c0_16, %c0_17, %c0_18] : memref<2x128x128xbf16, #tpu.memory_space<vmem>>, vector<1x128x128xbf16>
    %34 = vector.shape_cast %33 : vector<1x128x128xbf16> to vector<128x128xbf16>
    %cst_19 = arith.constant dense<0.000000e+00> : vector<8x128xf32>
    %35 = tpu.matmul %32, %34, %cst_19 {dimension_numbers = #tpu.dot_dimension_numbers<[1], [0], [0], [1], [0, 0, 1, 1], [], []>} : vector<8x128xbf16>, vector<128x128xbf16>, vector<8x128xf32> -> vector<8x128xf32>
    %c0_20 = arith.constant 0 : index
    %c0_21 = arith.constant 0 : index
    %c0_22 = arith.constant 0 : index
    %36 = vector.load %arg7[%c0_20, %c0_21, %c0_22] : memref<2x1x128xf32, #tpu.memory_space<vmem>>, vector<1x1x128xf32>
    %37 = vector.shape_cast %36 : vector<1x1x128xf32> to vector<1x128xf32>
    %38 = vector.broadcast %37 : vector<1x128xf32> to vector<8x128xf32>
    %39 = arith.addf %35, %38 : vector<8x128xf32>
    %cst_23 = arith.constant 0.000000e+00 : f32
    %40 = vector.broadcast %cst_23 : f32 to vector<8x128xf32>
    %41 = arith.maximumf %39, %40 : vector<8x128xf32>
    %42 = arith.addf %5, %41 : vector<8x128xf32>
    %c1 = arith.constant 1 : index
    %c0_24 = arith.constant 0 : index
    %c0_25 = arith.constant 0 : index
    %43 = vector.load %arg4[%c1, %c0_24, %c0_25] : memref<2x1x128xf32, #tpu.memory_space<vmem>>, vector<1x1x128xf32>
    %44 = vector.shape_cast %43 : vector<1x1x128xf32> to vector<1x128xf32>
    %c1_26 = arith.constant 1 : index
    %c0_27 = arith.constant 0 : index
    %c0_28 = arith.constant 0 : index
    %45 = vector.load %arg5[%c1_26, %c0_27, %c0_28] : memref<2x1x128xf32, #tpu.memory_space<vmem>>, vector<1x1x128xf32>
    %46 = vector.shape_cast %45 : vector<1x1x128xf32> to vector<1x128xf32>
    %cst_29 = arith.constant dense<0.000000e+00> : vector<8xf32>
    %47 = vector.multi_reduction <add>, %42, %cst_29 [1] : vector<8x128xf32> to vector<8xf32>
    %48 = vector.shape_cast %47 : vector<8xf32> to vector<8x1xf32>
    %49 = arith.mulf %42, %42 : vector<8x128xf32>
    %cst_30 = arith.constant dense<0.000000e+00> : vector<8xf32>
    %50 = vector.multi_reduction <add>, %49, %cst_30 [1] : vector<8x128xf32> to vector<8xf32>
    %51 = vector.shape_cast %50 : vector<8xf32> to vector<8x1xf32>
    %cst_31 = arith.constant 3.125000e-02 : f32
    %52 = vector.broadcast %cst_31 : f32 to vector<8x1xf32>
    %53 = arith.mulf %48, %52 : vector<8x1xf32>
    %cst_32 = arith.constant 3.125000e-02 : f32
    %54 = vector.broadcast %cst_32 : f32 to vector<8x1xf32>
    %55 = arith.mulf %51, %54 : vector<8x1xf32>
    %56 = arith.mulf %53, %53 : vector<8x1xf32>
    %57 = arith.subf %55, %56 : vector<8x1xf32>
    %58 = vector.broadcast %53 : vector<8x1xf32> to vector<8x128xf32>
    %59 = arith.subf %42, %58 : vector<8x128xf32>
    %cst_33 = arith.constant 9.99999974E-6 : f32
    %60 = vector.broadcast %cst_33 : f32 to vector<8x1xf32>
    %61 = arith.addf %57, %60 : vector<8x1xf32>
    %62 = math.rsqrt %61 : vector<8x1xf32>
    %63 = vector.broadcast %62 : vector<8x1xf32> to vector<8x128xf32>
    %64 = arith.mulf %59, %63 : vector<8x128xf32>
    %65 = vector.broadcast %44 : vector<1x128xf32> to vector<8x128xf32>
    %66 = arith.mulf %64, %65 : vector<8x128xf32>
    %67 = vector.broadcast %46 : vector<1x128xf32> to vector<8x128xf32>
    %68 = arith.addf %66, %67 : vector<8x128xf32>
    %69 = arith.truncf %68 : vector<8x128xf32> to vector<8x128xbf16>
    %c1_34 = arith.constant 1 : index
    %c0_35 = arith.constant 0 : index
    %c0_36 = arith.constant 0 : index
    %70 = vector.load %arg6[%c1_34, %c0_35, %c0_36] : memref<2x128x128xbf16, #tpu.memory_space<vmem>>, vector<1x128x128xbf16>
    %71 = vector.shape_cast %70 : vector<1x128x128xbf16> to vector<128x128xbf16>
    %cst_37 = arith.constant dense<0.000000e+00> : vector<8x128xf32>
    %72 = tpu.matmul %69, %71, %cst_37 {dimension_numbers = #tpu.dot_dimension_numbers<[1], [0], [0], [1], [0, 0, 1, 1], [], []>} : vector<8x128xbf16>, vector<128x128xbf16>, vector<8x128xf32> -> vector<8x128xf32>
    %c1_38 = arith.constant 1 : index
    %c0_39 = arith.constant 0 : index
    %c0_40 = arith.constant 0 : index
    %73 = vector.load %arg7[%c1_38, %c0_39, %c0_40] : memref<2x1x128xf32, #tpu.memory_space<vmem>>, vector<1x1x128xf32>
    %74 = vector.shape_cast %73 : vector<1x1x128xf32> to vector<1x128xf32>
    %75 = vector.broadcast %74 : vector<1x128xf32> to vector<8x128xf32>
    %76 = arith.addf %72, %75 : vector<8x128xf32>
    %cst_41 = arith.constant 0.000000e+00 : f32
    %77 = vector.broadcast %cst_41 : f32 to vector<8x128xf32>
    %78 = arith.maximumf %76, %77 : vector<8x128xf32>
    %79 = arith.addf %42, %78 : vector<8x128xf32>
    %80 = arith.truncf %79 : vector<8x128xf32> to vector<8x128xbf16>
    %c0_42 = arith.constant 0 : index
    %c0_43 = arith.constant 0 : index
    %81 = vector.load %arg8[%c0_42, %c0_43] : memref<128x128xbf16, #tpu.memory_space<vmem>>, vector<128x128xbf16>
    %cst_44 = arith.constant dense<0.000000e+00> : vector<8x128xf32>
    %82 = tpu.matmul %80, %81, %cst_44 {dimension_numbers = #tpu.dot_dimension_numbers<[1], [0], [0], [1], [0, 0, 1, 1], [], []>} : vector<8x128xbf16>, vector<128x128xbf16>, vector<8x128xf32> -> vector<8x128xf32>
    %c0_45 = arith.constant 0 : index
    %c0_46 = arith.constant 0 : index
    %83 = vector.load %arg9[%c0_45, %c0_46] : memref<1x128xf32, #tpu.memory_space<vmem>>, vector<1x128xf32>
    %84 = vector.broadcast %83 : vector<1x128xf32> to vector<8x128xf32>
    %85 = arith.addf %82, %84 : vector<8x128xf32>
    %c0_47 = arith.constant 0 : index
    %c0_48 = arith.constant 0 : index
    %86 = vector.load %arg10[%c0_47, %c0_48] : memref<1x128xf32, #tpu.memory_space<vmem>>, vector<1x128xf32>
    %c0_49 = arith.constant 0 : index
    %c0_50 = arith.constant 0 : index
    %87 = vector.load %arg11[%c0_49, %c0_50] : memref<1x128xf32, #tpu.memory_space<vmem>>, vector<1x128xf32>
    %cst_51 = arith.constant dense<0.000000e+00> : vector<8xf32>
    %88 = vector.multi_reduction <add>, %85, %cst_51 [1] : vector<8x128xf32> to vector<8xf32>
    %89 = vector.shape_cast %88 : vector<8xf32> to vector<8x1xf32>
    %90 = arith.mulf %85, %85 : vector<8x128xf32>
    %cst_52 = arith.constant dense<0.000000e+00> : vector<8xf32>
    %91 = vector.multi_reduction <add>, %90, %cst_52 [1] : vector<8x128xf32> to vector<8xf32>
    %92 = vector.shape_cast %91 : vector<8xf32> to vector<8x1xf32>
    %cst_53 = arith.constant 1.562500e-02 : f32
    %93 = vector.broadcast %cst_53 : f32 to vector<8x1xf32>
    %94 = arith.mulf %89, %93 : vector<8x1xf32>
    %cst_54 = arith.constant 1.562500e-02 : f32
    %95 = vector.broadcast %cst_54 : f32 to vector<8x1xf32>
    %96 = arith.mulf %92, %95 : vector<8x1xf32>
    %97 = arith.mulf %94, %94 : vector<8x1xf32>
    %98 = arith.subf %96, %97 : vector<8x1xf32>
    %99 = vector.broadcast %94 : vector<8x1xf32> to vector<8x128xf32>
    %100 = arith.subf %85, %99 : vector<8x128xf32>
    %cst_55 = arith.constant 9.99999974E-6 : f32
    %101 = vector.broadcast %cst_55 : f32 to vector<8x1xf32>
    %102 = arith.addf %98, %101 : vector<8x1xf32>
    %103 = math.rsqrt %102 : vector<8x1xf32>
    %104 = vector.broadcast %103 : vector<8x1xf32> to vector<8x128xf32>
    %105 = arith.mulf %100, %104 : vector<8x128xf32>
    %106 = vector.broadcast %86 : vector<1x128xf32> to vector<8x128xf32>
    %107 = arith.mulf %105, %106 : vector<8x128xf32>
    %108 = vector.broadcast %87 : vector<1x128xf32> to vector<8x128xf32>
    %109 = arith.addf %107, %108 : vector<8x128xf32>
    %cst_56 = arith.constant 0.000000e+00 : f32
    %110 = vector.broadcast %cst_56 : f32 to vector<8x128xf32>
    %111 = arith.maximumf %109, %110 : vector<8x128xf32>
    %112 = arith.truncf %111 : vector<8x128xf32> to vector<8x128xbf16>
    %c0_57 = arith.constant 0 : index
    %c0_58 = arith.constant 0 : index
    %113 = vector.load %arg12[%c0_57, %c0_58] : memref<128x128xbf16, #tpu.memory_space<vmem>>, vector<128x128xbf16>
    %cst_59 = arith.constant dense<0.000000e+00> : vector<8x128xf32>
    %114 = tpu.matmul %112, %113, %cst_59 {dimension_numbers = #tpu.dot_dimension_numbers<[1], [0], [0], [1], [0, 0, 1, 1], [], []>} : vector<8x128xbf16>, vector<128x128xbf16>, vector<8x128xf32> -> vector<8x128xf32>
    %c0_60 = arith.constant 0 : index
    %c0_61 = arith.constant 0 : index
    %115 = vector.load %arg13[%c0_60, %c0_61] : memref<1x128xf32, #tpu.memory_space<vmem>>, vector<1x128xf32>
    %116 = vector.broadcast %115 : vector<1x128xf32> to vector<8x128xf32>
    %117 = arith.addf %114, %116 : vector<8x128xf32>
    %c0_62 = arith.constant 0 : index
    %c0_63 = arith.constant 0 : index
    %118 = vector.load %arg14[%c0_62, %c0_63] : memref<8x128xf32, #tpu.memory_space<vmem>>, vector<8x128xf32>
    tpu.vector_store %arg14[%c0_62, %c0_63], %117 {strides = array<i32>} : memref<8x128xf32, #tpu.memory_space<vmem>>, vector<8x128xf32>,
    return
  }
  func.func @transform_0(%arg0: i32) -> (i32, i32) {
    %c0_i32 = arith.constant 0 : i32
    %c0_i32_0 = arith.constant 0 : i32
    return %arg0, %c0_i32 : i32, i32
  }
  func.func @transform_1(%arg0: i32) -> (i32, i32) {
    %c0_i32 = arith.constant 0 : i32
    %c0_i32_0 = arith.constant 0 : i32
    %c0_i32_1 = arith.constant 0 : i32
    return %c0_i32, %c0_i32_0 : i32, i32
  }
  func.func @transform_2(%arg0: i32) -> (i32, i32) {
    %c0_i32 = arith.constant 0 : i32
    %c0_i32_0 = arith.constant 0 : i32
    %c0_i32_1 = arith.constant 0 : i32
    return %c0_i32, %c0_i32_0 : i32, i32
  }
  func.func @transform_3(%arg0: i32) -> (i32, i32, i32) {
    %c0_i32 = arith.constant 0 : i32
    %c0_i32_0 = arith.constant 0 : i32
    %c0_i32_1 = arith.constant 0 : i32
    %c0_i32_2 = arith.constant 0 : i32
    return %c0_i32, %c0_i32_0, %c0_i32_1 : i32, i32, i32
  }
  func.func @transform_4(%arg0: i32) -> (i32, i32, i32) {
    %c0_i32 = arith.constant 0 : i32
    %c0_i32_0 = arith.constant 0 : i32
    %c0_i32_1 = arith.constant 0 : i32
    %c0_i32_2 = arith.constant 0 : i32
    return %c0_i32, %c0_i32_0, %c0_i32_1 : i32, i32, i32
  }
  func.func @transform_5(%arg0: i32) -> (i32, i32, i32) {
    %c0_i32 = arith.constant 0 : i32
    %c0_i32_0 = arith.constant 0 : i32
    %c0_i32_1 = arith.constant 0 : i32
    %c0_i32_2 = arith.constant 0 : i32
    return %c0_i32, %c0_i32_0, %c0_i32_1 : i32, i32, i32
  }
  func.func @transform_6(%arg0: i32) -> (i32, i32, i32) {
    %c0_i32 = arith.constant 0 : i32
    %c0_i32_0 = arith.constant 0 : i32
    %c0_i32_1 = arith.constant 0 : i32
    %c0_i32_2 = arith.constant 0 : i32
    return %c0_i32, %c0_i32_0, %c0_i32_1 : i32, i32, i32
  }
  func.func @transform_7(%arg0: i32) -> (i32, i32) {
    %c0_i32 = arith.constant 0 : i32
    %c0_i32_0 = arith.constant 0 : i32
    %c0_i32_1 = arith.constant 0 : i32
    return %c0_i32, %c0_i32_0 : i32, i32
  }
  func.func @transform_8(%arg0: i32) -> (i32, i32) {
    %c0_i32 = arith.constant 0 : i32
    %c0_i32_0 = arith.constant 0 : i32
    %c0_i32_1 = arith.constant 0 : i32
    return %c0_i32, %c0_i32_0 : i32, i32
  }
  func.func @transform_9(%arg0: i32) -> (i32, i32) {
    %c0_i32 = arith.constant 0 : i32
    %c0_i32_0 = arith.constant 0 : i32
    %c0_i32_1 = arith.constant 0 : i32
    return %c0_i32, %c0_i32_0 : i32, i32
  }
  func.func @transform_10(%arg0: i32) -> (i32, i32) {
    %c0_i32 = arith.constant 0 : i32
    %c0_i32_0 = arith.constant 0 : i32
    %c0_i32_1 = arith.constant 0 : i32
    return %c0_i32, %c0_i32_0 : i32, i32
  }
  func.func @transform_11(%arg0: i32) -> (i32, i32) {
    %c0_i32 = arith.constant 0 : i32
    %c0_i32_0 = arith.constant 0 : i32
    %c0_i32_1 = arith.constant 0 : i32
    return %c0_i32, %c0_i32_0 : i32, i32
  }
  func.func @transform_12(%arg0: i32) -> (i32, i32) {
    %c0_i32 = arith.constant 0 : i32
    %c0_i32_0 = arith.constant 0 : i32
    %c0_i32_1 = arith.constant 0 : i32
    return %c0_i32, %c0_i32_0 : i32, i32
  }
  func.func @transform_13(%arg0: i32) -> (i32, i32) {
    %c0_i32 = arith.constant 0 : i32
    %c0_i32_0 = arith.constant 0 : i32
    return %arg0, %c0_i32 : i32, i32
  }
}

</mosaic_0001>

<llo_original>
// kernel: tpu_custom_call.1
$region0: #{tpu_custom_call.1}
  #allocation0 [shape = 'u32[]', space=smem, size = 0x4, offset = 0x4, fixed_abs, tag = 'smem constant byte address 0x4 - core index']
  #allocation1 [shape = 'u32[144,128]{1,0:T(1,128)}', space=vmem, size = 0x12000, scoped, tag = 'internal scratch']
  %s0 = inlined_call_operand.hbm [shape: bf16[8,128], index: 0, kind: input, shape index: {}]
  %s1 = inlined_call_operand.hbm [shape: bf16[128,128], index: 1, kind: input, shape index: {}]
  %s2 = inlined_call_operand.vmem [shape: f32[1,128], index: 2, kind: input, shape index: {}]
  %s3 = inlined_call_operand.vmem [shape: f32[2,1,128], index: 3, kind: input, shape index: {}]
  %s4 = inlined_call_operand.vmem [shape: f32[2,1,128], index: 4, kind: input, shape index: {}]
  %s5 = inlined_call_operand.hbm [shape: bf16[2,128,128], index: 5, kind: input, shape index: {}]
  %s6 = inlined_call_operand.vmem [shape: f32[2,1,128], index: 6, kind: input, shape index: {}]
  %s7 = inlined_call_operand.hbm [shape: bf16[128,128], index: 7, kind: input, shape index: {}]
  %s8 = inlined_call_operand.vmem [shape: f32[1,128], index: 8, kind: input, shape index: {}]
  %s9 = inlined_call_operand.vmem [shape: f32[1,128], index: 9, kind: input, shape index: {}]
  %s10 = inlined_call_operand.vmem [shape: f32[1,128], index: 10, kind: input, shape index: {}]
  %s11 = inlined_call_operand.hbm [shape: bf16[128,128], index: 11, kind: input, shape index: {}]
  %s12 = inlined_call_operand.vmem [shape: f32[1,128], index: 12, kind: input, shape index: {}]
  %s13 = inlined_call_operand.hbm [shape: f32[8,128], index: 13, kind: output, shape index: {}]
  %s14 = sld [smem:[#allocation0]]
  $region82: #{tpu_custom_call.1} parent=0
    _
  %s16 = ssub.s32 1, %s14
  %s17 = scalar_select 0, %s16, %s14
  $region1: #{tpu_custom_call.1} parent=0
    #allocation2 [shape = 'u8[2048]{0}', space=vmem, size = 0x800, scoped, tag = 'input window, operand 0, single buffered']
    #allocation3 [shape = 's32[1]{0}', space=sflag, size = 0x4, scoped, tag = 'scoped memory for tpu_custom_call.1']
    #allocation4 [shape = 's32[1]{0}', space=sflag, size = 0x4, scoped, tag = 'scoped memory for tpu_custom_call.1']
    #allocation5 [shape = 'u8[32768]{0}', space=vmem, size = 0x8000, scoped, tag = 'input window, operand 1, single buffered']
    #allocation6 [shape = 's32[1]{0}', space=sflag, size = 0x4, scoped, tag = 'scoped memory for tpu_custom_call.1']
    #allocation7 [shape = 'u8[65536]{0}', space=vmem, size = 0x10000, scoped, tag = 'input window, operand 5, single buffered']
    #allocation8 [shape = 'u8[32768]{0}', space=vmem, size = 0x8000, scoped, tag = 'input window, operand 7, single buffered']
    #allocation9 [shape = 's32[1]{0}', space=sflag, size = 0x4, scoped, tag = 'scoped memory for tpu_custom_call.1']
    #allocation10 [shape = 'u8[32768]{0}', space=vmem, size = 0x8000, scoped, tag = 'input window, operand 11, single buffered']
    #allocation11 [shape = 'u8[4096]{0}', space=vmem, size = 0x1000, scoped, tag = 'output window, operand 0, single buffered']
    %18 = vsyncpa [#allocation3], 0
    %19 = vsyncpa [#allocation6], 0
    %20 = vsyncpa [#allocation9], 0
    %21 = vsyncpa [#allocation4], 0
    // Predicated region
    $region2: #{tpu_custom_call.1} parent=1 // pred_check
      _
    $region3: #{tpu_custom_call.1} parent=1 // pred_check_branch
      %23 = sbr.rel (0) target = $region5
    $region4: #{tpu_custom_call.1} parent=1 // pred_region
      %s25 = ssub.s32 64, 64
      %26 = vsyncadd [#allocation3], %s25
      %s28 = sshll.u32 [#allocation2], 4
      %s29 = int_to_ptr.vmem [resolvable:$true] %s28
      %31 = dma.hbm_to_vmem [thread:$0]  %s0, 64, %s29, [#allocation3]
    $region5: #{tpu_custom_call.1} parent=1 // pred_fallthru
      _
    // Predicated region
    $region6: #{tpu_custom_call.1} parent=1 // pred_check
      _
    $region7: #{tpu_custom_call.1} parent=1 // pred_check_branch
      %33 = sbr.rel (0) target = $region9
    $region8: #{tpu_custom_call.1} parent=1 // pred_region
      %s35 = ssub.s32 1024, 1024
      %36 = vsyncadd [#allocation6], %s35
      %s37 = sshll.u32 [#allocation5], 4
      %s38 = int_to_ptr.vmem [resolvable:$true] %s37
      %43 = dma.hbm_to_vmem [thread:$0]  %s1, 1024, %s38, [#allocation6], 64, 64, 4
    $region9: #{tpu_custom_call.1} parent=1 // pred_fallthru
      _
    // Predicated region
    $region10: #{tpu_custom_call.1} parent=1 // pred_check
      _
    $region11: #{tpu_custom_call.1} parent=1 // pred_check_branch
      %45 = sbr.rel (0) target = $region13
    $region12: #{tpu_custom_call.1} parent=1 // pred_region
      _
    $region13: #{tpu_custom_call.1} parent=1 // pred_fallthru
      _
    // Predicated region
    $region14: #{tpu_custom_call.1} parent=1 // pred_check
      _
    $region15: #{tpu_custom_call.1} parent=1 // pred_check_branch
      %47 = sbr.rel (0) target = $region17
    $region16: #{tpu_custom_call.1} parent=1 // pred_region
      _
    $region17: #{tpu_custom_call.1} parent=1 // pred_fallthru
      _
    // Predicated region
    $region18: #{tpu_custom_call.1} parent=1 // pred_check
      _
    $region19: #{tpu_custom_call.1} parent=1 // pred_check_branch
      %49 = sbr.rel (0) target = $region21
    $region20: #{tpu_custom_call.1} parent=1 // pred_region
      _
    $region21: #{tpu_custom_call.1} parent=1 // pred_fallthru
      _
    // Predicated region
    $region22: #{tpu_custom_call.1} parent=1 // pred_check
      _
    $region23: #{tpu_custom_call.1} parent=1 // pred_check_branch
      %51 = sbr.rel (0) target = $region25
    $region24: #{tpu_custom_call.1} parent=1 // pred_region
      %s53 = ssub.s32 2048, 2048
      %54 = vsyncadd [#allocation6], %s53
      %s55 = sshll.u32 [#allocation7], 4
      %s56 = int_to_ptr.vmem [resolvable:$true] %s55
      %61 = dma.hbm_to_vmem [thread:$0]  %s5, 2048, %s56, [#allocation6], 64, 64, 4
    $region25: #{tpu_custom_call.1} parent=1 // pred_fallthru
      _
    // Predicated region
    $region26: #{tpu_custom_call.1} parent=1 // pred_check
      _
    $region27: #{tpu_custom_call.1} parent=1 // pred_check_branch
      %63 = sbr.rel (0) target = $region29
    $region28: #{tpu_custom_call.1} parent=1 // pred_region
      _
    $region29: #{tpu_custom_call.1} parent=1 // pred_fallthru
      _
    // Predicated region
    $region30: #{tpu_custom_call.1} parent=1 // pred_check
      _
    $region31: #{tpu_custom_call.1} parent=1 // pred_check_branch
      %65 = sbr.rel (0) target = $region33
    $region32: #{tpu_custom_call.1} parent=1 // pred_region
      %s67 = ssub.s32 1024, 1024
      %68 = vsyncadd [#allocation9], %s67
      %s69 = sshll.u32 [#allocation8], 4
      %s70 = int_to_ptr.vmem [resolvable:$true] %s69
      %75 = dma.hbm_to_vmem [thread:$0]  %s7, 1024, %s70, [#allocation9], 64, 64, 4
    $region33: #{tpu_custom_call.1} parent=1 // pred_fallthru
      _
    // Predicated region
    $region34: #{tpu_custom_call.1} parent=1 // pred_check
      _
    $region35: #{tpu_custom_call.1} parent=1 // pred_check_branch
      %77 = sbr.rel (0) target = $region37
    $region36: #{tpu_custom_call.1} parent=1 // pred_region
      _
    $region37: #{tpu_custom_call.1} parent=1 // pred_fallthru
      _
    // Predicated region
    $region38: #{tpu_custom_call.1} parent=1 // pred_check
      _
    $region39: #{tpu_custom_call.1} parent=1 // pred_check_branch
      %79 = sbr.rel (0) target = $region41
    $region40: #{tpu_custom_call.1} parent=1 // pred_region
      _
    $region41: #{tpu_custom_call.1} parent=1 // pred_fallthru
      _
    // Predicated region
    $region42: #{tpu_custom_call.1} parent=1 // pred_check
      _
    $region43: #{tpu_custom_call.1} parent=1 // pred_check_branch
      %81 = sbr.rel (0) target = $region45
    $region44: #{tpu_custom_call.1} parent=1 // pred_region
      _
    $region45: #{tpu_custom_call.1} parent=1 // pred_fallthru
      _
    // Predicated region
    $region46: #{tpu_custom_call.1} parent=1 // pred_check
      _
    $region47: #{tpu_custom_call.1} parent=1 // pred_check_branch
      %83 = sbr.rel (0) target = $region49
    $region48: #{tpu_custom_call.1} parent=1 // pred_region
      %s85 = ssub.s32 1024, 1024
      %86 = vsyncadd [#allocation9], %s85
      %s87 = sshll.u32 [#allocation10], 4
      %s88 = int_to_ptr.vmem [resolvable:$true] %s87
      %93 = dma.hbm_to_vmem [thread:$0]  %s11, 1024, %s88, [#allocation9], 64, 64, 4
    $region49: #{tpu_custom_call.1} parent=1 // pred_fallthru
      _
    // Predicated region
    $region50: #{tpu_custom_call.1} parent=1 // pred_check
      _
    $region51: #{tpu_custom_call.1} parent=1 // pred_check_branch
      %95 = sbr.rel (0) target = $region53
    $region52: #{tpu_custom_call.1} parent=1 // pred_region
      _
    $region53: #{tpu_custom_call.1} parent=1 // pred_fallthru
      _
    // Predicated region
    $region54: #{tpu_custom_call.1} parent=1 // pred_check
      _
    $region55: #{tpu_custom_call.1} parent=1 // pred_check_branch
      %97 = sbr.rel (0) target = $region57
    $region56: #{tpu_custom_call.1} parent=1 // pred_region
      %98 = dma.done [#allocation3], 64
    $region57: #{tpu_custom_call.1} parent=1 // pred_fallthru
      _
    // Predicated region
    $region58: #{tpu_custom_call.1} parent=1 // pred_check
      _
    $region59: #{tpu_custom_call.1} parent=1 // pred_check_branch
      %100 = sbr.rel (0) target = $region61
    $region60: #{tpu_custom_call.1} parent=1 // pred_region
      %101 = dma.done [#allocation6], 1024
    $region61: #{tpu_custom_call.1} parent=1 // pred_fallthru
      _
    // Predicated region
    $region62: #{tpu_custom_call.1} parent=1 // pred_check
      _
    $region63: #{tpu_custom_call.1} parent=1 // pred_check_branch
      %103 = sbr.rel (0) target = $region65
    $region64: #{tpu_custom_call.1} parent=1 // pred_region
      %104 = dma.done [#allocation6], 2048
    $region65: #{tpu_custom_call.1} parent=1 // pred_fallthru
      _
    // Predicated region
    $region66: #{tpu_custom_call.1} parent=1 // pred_check
      _
    $region67: #{tpu_custom_call.1} parent=1 // pred_check_branch
      %106 = sbr.rel (0) target = $region69
    $region68: #{tpu_custom_call.1} parent=1 // pred_region
      %107 = dma.done [#allocation9], 1024
    $region69: #{tpu_custom_call.1} parent=1 // pred_fallthru
      _
    // Predicated region
    $region70: #{tpu_custom_call.1} parent=1 // pred_check
      _
    $region71: #{tpu_custom_call.1} parent=1 // pred_check_branch
      %109 = sbr.rel (0) target = $region73
    $region72: #{tpu_custom_call.1} parent=1 // pred_region
      %110 = dma.done [#allocation9], 1024
    $region73: #{tpu_custom_call.1} parent=1 // pred_fallthru
      _
    %v112 = vld [vmem:[#allocation2] sm:$0xf]
    %v113 = vld [vmem:[#allocation5] sm:$0xf]
    %v114 = vld [vmem:[#allocation5 + $0x4] sm:$0xf]
    %v115 = vld [vmem:[#allocation5 + $0x8] sm:$0xf]
    %v116 = vld [vmem:[#allocation5 + $0xc] sm:$0xf]
    %v117 = vld [vmem:[#allocation5 + $0x10] sm:$0xf]
    %v118 = vld [vmem:[#allocation5 + $0x14] sm:$0xf]
    %v119 = vld [vmem:[#allocation5 + $0x18] sm:$0xf]
    %v120 = vld [vmem:[#allocation5 + $0x1c] sm:$0xf]
    %v121 = vld [vmem:[#allocation5 + $0x20] sm:$0xf]
    %v122 = vld [vmem:[#allocation5 + $0x24] sm:$0xf]
    %v123 = vld [vmem:[#allocation5 + $0x28] sm:$0xf]
    %v124 = vld [vmem:[#allocation5 + $0x2c] sm:$0xf]
    %v125 = vld [vmem:[#allocation5 + $0x30] sm:$0xf]
    %v126 = vld [vmem:[#allocation5 + $0x34] sm:$0xf]
    %v127 = vld [vmem:[#allocation5 + $0x38] sm:$0xf]
    %v128 = vld [vmem:[#allocation5 + $0x3c] sm:$0xf]
    %v129 = vld [vmem:[%s2] sm:$0x1]
    %v131 = vlaneseq
    %v132 = vshrl.u32 %v131, 7
    %v133 = vsub.s32 0, %v132
    %v134 = vrot.slane %v129, %v133
    %v152 = vunpack.c.l.b16 %v113
    %v153 = vunpack.c.l.b16 %v114
    %v154 = vunpack.c.l.b16 %v115
    %v155 = vunpack.c.l.b16 %v116
    %v156 = vunpack.c.l.b16 %v117
    %v157 = vunpack.c.l.b16 %v118
    %v158 = vunpack.c.l.b16 %v119
    %v159 = vunpack.c.l.b16 %v120
    %v160 = vunpack.c.l.b16 %v121
    %v161 = vunpack.c.l.b16 %v122
    %v162 = vunpack.c.l.b16 %v123
    %v163 = vunpack.c.l.b16 %v124
    %v164 = vunpack.c.l.b16 %v125
    %v165 = vunpack.c.l.b16 %v126
    %v166 = vunpack.c.l.b16 %v127
    %v167 = vunpack.c.l.b16 %v128
    %v168 = vpack.c.b16 %v153, %v152
    %v169 = vpack.c.b16 %v155, %v154
    %v170 = vpack.c.b16 %v157, %v156
    %v171 = vpack.c.b16 %v159, %v158
    %v172 = vpack.c.b16 %v161, %v160
    %v173 = vpack.c.b16 %v163, %v162
    %v174 = vpack.c.b16 %v165, %v164
    %v175 = vpack.c.b16 %v167, %v166
    %184 = vmatprep.subr.bf16.mxu0 0
    %185 = vmatpush1.bf16.msra.mxu0 %v168
    %186 = vmatprep.subr.bf16.mxu0 0
    %187 = vmatpush1.bf16.msra.mxu0 %v169
    %188 = vmatprep.subr.bf16.mxu0 0
    %189 = vmatpush1.bf16.msra.mxu0 %v170
    %190 = vmatprep.subr.bf16.mxu0 0
    %191 = vmatpush1.bf16.msra.mxu0 %v171
    %192 = vmatprep.subr.bf16.mxu0 0
    %193 = vmatpush1.bf16.msra.mxu0 %v172
    %194 = vmatprep.subr.bf16.mxu0 0
    %195 = vmatpush1.bf16.msra.mxu0 %v173
    %196 = vmatprep.subr.bf16.mxu0 0
    %197 = vmatpush1.bf16.msra.mxu0 %v174
    %198 = vmatprep.subr.bf16.mxu0 0
    %199 = vmatpush1.bf16.msra.mxu0 %v175
    %200 = vmatprep.subr.bf16.mxu0 0
    %201 = vmatpush1.bf16.msra.mxu0 0
    %202 = vmatprep.subr.bf16.mxu0 0
    %203 = vmatpush1.bf16.msra.mxu0 0
    %204 = vmatprep.subr.bf16.mxu0 0
    %205 = vmatpush1.bf16.msra.mxu0 0
    %206 = vmatprep.subr.bf16.mxu0 0
    %207 = vmatpush1.bf16.msra.mxu0 0
    %208 = vmatprep.subr.bf16.mxu0 0
    %209 = vmatpush1.bf16.msra.mxu0 0
    %210 = vmatprep.subr.bf16.mxu0 0
    %211 = vmatpush1.bf16.msra.mxu0 0
    %212 = vmatprep.subr.bf16.mxu0 0
    %213 = vmatpush1.bf16.msra.mxu0 0
    %214 = vmatprep.subr.bf16.mxu0 0
    %215 = vmatpush1.bf16.msra.mxu0 0
    %216 = vmatprep.mubr.bf16.mxu0 0
    %217 = vmatmul.mubr.bf16.gmra.mrb[0].mxu0 %v112
    %v218 = vpop.f32.mrb[0].mxu0
    %v219 = vadd.f32 %v134, %v218
    %v220 = vpop.f32.mrb[0].mxu0
    %v221 = vpop.f32.mrb[0].mxu0
    %v222 = vpop.f32.mrb[0].mxu0
    %223 = vdwg.mxu0
    %v224 = vld [vmem:[%s3] sm:$0x1]
    %v225 = vld [vmem:[%s4] sm:$0x1]
    %226 = vadd.xlane.f32.xlu0 %v219
    %v227 = vpop.xlane.xlu0 %226
    %v228 = vmul.f32 %v219, %v219
    %229 = vadd.xlane.f32.xlu0 %v228
    %v230 = vpop.xlane.xlu0 %229
    %v231 = vmul.f32 %v227, 0.03125
    %v232 = vmul.f32 %v230, 0.03125
    %v233 = vmul.f32 %v231, %v231
    %v234 = vsub.f32 %v232, %v233
    %v235 = vsub.f32 %v219, %v231
    %v236 = vadd.f32 %v234, 1e-05
    %v237 = vrsqrt.pop %v236
    %v238 = vmul.f32 %v235, %v237
    %v240 = vlaneseq
    %v241 = vshrl.u32 %v240, 7
    %v242 = vsub.s32 0, %v241
    %v243 = vrot.slane %v224, %v242
    %v245 = vmul.f32 %v238, %v243
    %v247 = vlaneseq
    %v248 = vshrl.u32 %v247, 7
    %v249 = vsub.s32 0, %v248
    %v250 = vrot.slane %v225, %v249
    %v252 = vadd.f32 %v245, %v250
    %v253 = vpack.c.bf16 %v252, %v252
    %v254 = vld [vmem:[#allocation7] sm:$0xf]
    %v255 = vld [vmem:[#allocation7 + $0x4] sm:$0xf]
    %v256 = vld [vmem:[#allocation7 + $0x8] sm:$0xf]
    %v257 = vld [vmem:[#allocation7 + $0xc] sm:$0xf]
    %v258 = vld [vmem:[#allocation7 + $0x10] sm:$0xf]
    %v259 = vld [vmem:[#allocation7 + $0x14] sm:$0xf]
    %v260 = vld [vmem:[#allocation7 + $0x18] sm:$0xf]
    %v261 = vld [vmem:[#allocation7 + $0x1c] sm:$0xf]
    %v262 = vld [vmem:[#allocation7 + $0x20] sm:$0xf]
    %v263 = vld [vmem:[#allocation7 + $0x24] sm:$0xf]
    %v264 = vld [vmem:[#allocation7 + $0x28] sm:$0xf]
    %v265 = vld [vmem:[#allocation7 + $0x2c] sm:$0xf]
    %v266 = vld [vmem:[#allocation7 + $0x30] sm:$0xf]
    %v267 = vld [vmem:[#allocation7 + $0x34] sm:$0xf]
    %v268 = vld [vmem:[#allocation7 + $0x38] sm:$0xf]
    %v269 = vld [vmem:[#allocation7 + $0x3c] sm:$0xf]
    %v270 = vld [vmem:[%s6] sm:$0x1]
    %v272 = vlaneseq
    %v273 = vshrl.u32 %v272, 7
    %v274 = vsub.s32 0, %v273
    %v275 = vrot.slane %v270, %v274
    %v293 = vunpack.c.l.b16 %v254
    %v294 = vunpack.c.l.b16 %v255
    %v295 = vunpack.c.l.b16 %v256
    %v296 = vunpack.c.l.b16 %v257
    %v297 = vunpack.c.l.b16 %v258
    %v298 = vunpack.c.l.b16 %v259
    %v299 = vunpack.c.l.b16 %v260
    %v300 = vunpack.c.l.b16 %v261
    %v301 = vunpack.c.l.b16 %v262
    %v302 = vunpack.c.l.b16 %v263
    %v303 = vunpack.c.l.b16 %v264
    %v304 = vunpack.c.l.b16 %v265
    %v305 = vunpack.c.l.b16 %v266
    %v306 = vunpack.c.l.b16 %v267
    %v307 = vunpack.c.l.b16 %v268
    %v308 = vunpack.c.l.b16 %v269
    %v309 = vpack.c.b16 %v294, %v293
    %v310 = vpack.c.b16 %v296, %v295
    %v311 = vpack.c.b16 %v298, %v297
    %v312 = vpack.c.b16 %v300, %v299
    %v313 = vpack.c.b16 %v302, %v301
    %v314 = vpack.c.b16 %v304, %v303
    %v315 = vpack.c.b16 %v306, %v305
    %v316 = vpack.c.b16 %v308, %v307
    %325 = vmatprep.subr.bf16.mxu0 0
    %326 = vmatpush1.bf16.msra.mxu0 %v309
    %327 = vmatprep.subr.bf16.mxu0 0
    %328 = vmatpush1.bf16.msra.mxu0 %v310
    %329 = vmatprep.subr.bf16.mxu0 0
    %330 = vmatpush1.bf16.msra.mxu0 %v311
    %331 = vmatprep.subr.bf16.mxu0 0
    %332 = vmatpush1.bf16.msra.mxu0 %v312
    %333 = vmatprep.subr.bf16.mxu0 0
    %334 = vmatpush1.bf16.msra.mxu0 %v313
    %335 = vmatprep.subr.bf16.mxu0 0
    %336 = vmatpush1.bf16.msra.mxu0 %v314
    %337 = vmatprep.subr.bf16.mxu0 0
    %338 = vmatpush1.bf16.msra.mxu0 %v315
    %339 = vmatprep.subr.bf16.mxu0 0
    %340 = vmatpush1.bf16.msra.mxu0 %v316
    %341 = vmatprep.subr.bf16.mxu0 0
    %342 = vmatpush1.bf16.msra.mxu0 0
    %343 = vmatprep.subr.bf16.mxu0 0
    %344 = vmatpush1.bf16.msra.mxu0 0
    %345 = vmatprep.subr.bf16.mxu0 0
    %346 = vmatpush1.bf16.msra.mxu0 0
    %347 = vmatprep.subr.bf16.mxu0 0
    %348 = vmatpush1.bf16.msra.mxu0 0
    %349 = vmatprep.subr.bf16.mxu0 0
    %350 = vmatpush1.bf16.msra.mxu0 0
    %351 = vmatprep.subr.bf16.mxu0 0
    %352 = vmatpush1.bf16.msra.mxu0 0
    %353 = vmatprep.subr.bf16.mxu0 0
    %354 = vmatpush1.bf16.msra.mxu0 0
    %355 = vmatprep.subr.bf16.mxu0 0
    %356 = vmatpush1.bf16.msra.mxu0 0
    %357 = vmatprep.mubr.bf16.mxu0 0
    %358 = vmatmul.mubr.bf16.gmra.mrb[0].mxu0 %v253
    %v359 = vpop.f32.mrb[0].mxu0
    %v360 = vadd.f32 %v275, %v359
    %v361 = vpop.f32.mrb[0].mxu0
    %v362 = vpop.f32.mrb[0].mxu0
    %v363 = vpop.f32.mrb[0].mxu0
    %364 = vdwg.mxu0
    %v365 = vmax.f32 %v360, 0.0
    %v366 = vadd.f32 %v219, %v365
    %s367 = scalar_lea.vmem %s3, 1
    %v368 = vld [vmem:[%s367] sm:$0x1]
    %s369 = scalar_lea.vmem %s4, 1
    %v370 = vld [vmem:[%s369] sm:$0x1]
    %371 = vadd.xlane.f32.xlu0 %v366
    %v372 = vpop.xlane.xlu0 %371
    %v373 = vmul.f32 %v366, %v366
    %374 = vadd.xlane.f32.xlu0 %v373
    %v375 = vpop.xlane.xlu0 %374
    %v376 = vmul.f32 %v372, 0.03125
    %v377 = vmul.f32 %v375, 0.03125
    %v378 = vmul.f32 %v376, %v376
    %v379 = vsub.f32 %v377, %v378
    %v380 = vsub.f32 %v366, %v376
    %v381 = vadd.f32 %v379, 1e-05
    %v382 = vrsqrt.pop %v381
    %v383 = vmul.f32 %v380, %v382
    %v385 = vlaneseq
    %v386 = vshrl.u32 %v385, 7
    %v387 = vsub.s32 0, %v386
    %v388 = vrot.slane %v368, %v387
    %v390 = vmul.f32 %v383, %v388
    %v392 = vlaneseq
    %v393 = vshrl.u32 %v392, 7
    %v394 = vsub.s32 0, %v393
    %v395 = vrot.slane %v370, %v394
    %v397 = vadd.f32 %v390, %v395
    %v398 = vpack.c.bf16 %v397, %v397
    %s399 = scalar_lea.vmem [#allocation7], 64
    %v400 = vld [vmem:[%s399] sm:$0xf]
    %v401 = vld [vmem:[%s399 + $0x4] sm:$0xf]
    %v402 = vld [vmem:[%s399 + $0x8] sm:$0xf]
    %v403 = vld [vmem:[%s399 + $0xc] sm:$0xf]
    %v404 = vld [vmem:[%s399 + $0x10] sm:$0xf]
    %v405 = vld [vmem:[%s399 + $0x14] sm:$0xf]
    %v406 = vld [vmem:[%s399 + $0x18] sm:$0xf]
    %v407 = vld [vmem:[%s399 + $0x1c] sm:$0xf]
    %v408 = vld [vmem:[%s399 + $0x20] sm:$0xf]
    %v409 = vld [vmem:[%s399 + $0x24] sm:$0xf]
    %v410 = vld [vmem:[%s399 + $0x28] sm:$0xf]
    %v411 = vld [vmem:[%s399 + $0x2c] sm:$0xf]
    %v412 = vld [vmem:[%s399 + $0x30] sm:$0xf]
    %v413 = vld [vmem:[%s399 + $0x34] sm:$0xf]
    %v414 = vld [vmem:[%s399 + $0x38] sm:$0xf]
    %v415 = vld [vmem:[%s399 + $0x3c] sm:$0xf]
    %s416 = scalar_lea.vmem %s6, 1
    %v417 = vld [vmem:[%s416] sm:$0x1]
    %v419 = vlaneseq
    %v420 = vshrl.u32 %v419, 7
    %v421 = vsub.s32 0, %v420
    %v422 = vrot.slane %v417, %v421
    %v440 = vunpack.c.l.b16 %v400
    %v441 = vunpack.c.l.b16 %v401
    %v442 = vunpack.c.l.b16 %v402
    %v443 = vunpack.c.l.b16 %v403
    %v444 = vunpack.c.l.b16 %v404
    %v445 = vunpack.c.l.b16 %v405
    %v446 = vunpack.c.l.b16 %v406
    %v447 = vunpack.c.l.b16 %v407
    %v448 = vunpack.c.l.b16 %v408
    %v449 = vunpack.c.l.b16 %v409
    %v450 = vunpack.c.l.b16 %v410
    %v451 = vunpack.c.l.b16 %v411
    %v452 = vunpack.c.l.b16 %v412
    %v453 = vunpack.c.l.b16 %v413
    %v454 = vunpack.c.l.b16 %v414
    %v455 = vunpack.c.l.b16 %v415
    %v456 = vpack.c.b16 %v441, %v440
    %v457 = vpack.c.b16 %v443, %v442
    %v458 = vpack.c.b16 %v445, %v444
    %v459 = vpack.c.b16 %v447, %v446
    %v460 = vpack.c.b16 %v449, %v448
    %v461 = vpack.c.b16 %v451, %v450
    %v462 = vpack.c.b16 %v453, %v452
    %v463 = vpack.c.b16 %v455, %v454
    %472 = vmatprep.subr.bf16.mxu0 0
    %473 = vmatpush1.bf16.msra.mxu0 %v456
    %474 = vmatprep.subr.bf16.mxu0 0
    %475 = vmatpush1.bf16.msra.mxu0 %v457
    %476 = vmatprep.subr.bf16.mxu0 0
    %477 = vmatpush1.bf16.msra.mxu0 %v458
    %478 = vmatprep.subr.bf16.mxu0 0
    %479 = vmatpush1.bf16.msra.mxu0 %v459
    %480 = vmatprep.subr.bf16.mxu0 0
    %481 = vmatpush1.bf16.msra.mxu0 %v460
    %482 = vmatprep.subr.bf16.mxu0 0
    %483 = vmatpush1.bf16.msra.mxu0 %v461
    %484 = vmatprep.subr.bf16.mxu0 0
    %485 = vmatpush1.bf16.msra.mxu0 %v462
    %486 = vmatprep.subr.bf16.mxu0 0
    %487 = vmatpush1.bf16.msra.mxu0 %v463
    %488 = vmatprep.subr.bf16.mxu0 0
    %489 = vmatpush1.bf16.msra.mxu0 0
    %490 = vmatprep.subr.bf16.mxu0 0
    %491 = vmatpush1.bf16.msra.mxu0 0
    %492 = vmatprep.subr.bf16.mxu0 0
    %493 = vmatpush1.bf16.msra.mxu0 0
    %494 = vmatprep.subr.bf16.mxu0 0
    %495 = vmatpush1.bf16.msra.mxu0 0
    %496 = vmatprep.subr.bf16.mxu0 0
    %497 = vmatpush1.bf16.msra.mxu0 0
    %498 = vmatprep.subr.bf16.mxu0 0
    %499 = vmatpush1.bf16.msra.mxu0 0
    %500 = vmatprep.subr.bf16.mxu0 0
    %501 = vmatpush1.bf16.msra.mxu0 0
    %502 = vmatprep.subr.bf16.mxu0 0
    %503 = vmatpush1.bf16.msra.mxu0 0
    %504 = vmatprep.mubr.bf16.mxu0 0
    %505 = vmatmul.mubr.bf16.gmra.mrb[0].mxu0 %v398
    %v506 = vpop.f32.mrb[0].mxu0
    %v507 = vadd.f32 %v422, %v506
    %v508 = vpop.f32.mrb[0].mxu0
    %v509 = vpop.f32.mrb[0].mxu0
    %v510 = vpop.f32.mrb[0].mxu0
    %511 = vdwg.mxu0
    %v512 = vmax.f32 %v507, 0.0
    %v513 = vadd.f32 %v366, %v512
    %v514 = vpack.c.bf16 %v513, %v513
    %v515 = vld [vmem:[#allocation8] sm:$0xf]
    %v516 = vld [vmem:[#allocation8 + $0x4] sm:$0xf]
    %v517 = vld [vmem:[#allocation8 + $0x8] sm:$0xf]
    %v518 = vld [vmem:[#allocation8 + $0xc] sm:$0xf]
    %v519 = vld [vmem:[#allocation8 + $0x10] sm:$0xf]
    %v520 = vld [vmem:[#allocation8 + $0x14] sm:$0xf]
    %v521 = vld [vmem:[#allocation8 + $0x18] sm:$0xf]
    %v522 = vld [vmem:[#allocation8 + $0x1c] sm:$0xf]
    %v523 = vld [vmem:[#allocation8 + $0x20] sm:$0xf]
    %v524 = vld [vmem:[#allocation8 + $0x24] sm:$0xf]
    %v525 = vld [vmem:[#allocation8 + $0x28] sm:$0xf]
    %v526 = vld [vmem:[#allocation8 + $0x2c] sm:$0xf]
    %v527 = vld [vmem:[#allocation8 + $0x30] sm:$0xf]
    %v528 = vld [vmem:[#allocation8 + $0x34] sm:$0xf]
    %v529 = vld [vmem:[#allocation8 + $0x38] sm:$0xf]
    %v530 = vld [vmem:[#allocation8 + $0x3c] sm:$0xf]
    %v531 = vld [vmem:[%s8] sm:$0x1]
    %v533 = vlaneseq
    %v534 = vshrl.u32 %v533, 7
    %v535 = vsub.s32 0, %v534
    %v536 = vrot.slane %v531, %v535
    %v554 = vunpack.c.l.b16 %v515
    %v555 = vunpack.c.l.b16 %v516
    %v556 = vunpack.c.l.b16 %v517
    %v557 = vunpack.c.l.b16 %v518
    %v558 = vunpack.c.l.b16 %v519
    %v559 = vunpack.c.l.b16 %v520
    %v560 = vunpack.c.l.b16 %v521
    %v561 = vunpack.c.l.b16 %v522
    %v562 = vunpack.c.l.b16 %v523
    %v563 = vunpack.c.l.b16 %v524
    %v564 = vunpack.c.l.b16 %v525
    %v565 = vunpack.c.l.b16 %v526
    %v566 = vunpack.c.l.b16 %v527
    %v567 = vunpack.c.l.b16 %v528
    %v568 = vunpack.c.l.b16 %v529
    %v569 = vunpack.c.l.b16 %v530
    %v570 = vpack.c.b16 %v555, %v554
    %v571 = vpack.c.b16 %v557, %v556
    %v572 = vpack.c.b16 %v559, %v558
    %v573 = vpack.c.b16 %v561, %v560
    %v574 = vpack.c.b16 %v563, %v562
    %v575 = vpack.c.b16 %v565, %v564
    %v576 = vpack.c.b16 %v567, %v566
    %v577 = vpack.c.b16 %v569, %v568
    %586 = vmatprep.subr.bf16.mxu0 0
    %587 = vmatpush1.bf16.msra.mxu0 %v570
    %588 = vmatprep.subr.bf16.mxu0 0
    %589 = vmatpush1.bf16.msra.mxu0 %v571
    %590 = vmatprep.subr.bf16.mxu0 0
    %591 = vmatpush1.bf16.msra.mxu0 %v572
    %592 = vmatprep.subr.bf16.mxu0 0
    %593 = vmatpush1.bf16.msra.mxu0 %v573
    %594 = vmatprep.subr.bf16.mxu0 0
    %595 = vmatpush1.bf16.msra.mxu0 %v574
    %596 = vmatprep.subr.bf16.mxu0 0
    %597 = vmatpush1.bf16.msra.mxu0 %v575
    %598 = vmatprep.subr.bf16.mxu0 0
    %599 = vmatpush1.bf16.msra.mxu0 %v576
    %600 = vmatprep.subr.bf16.mxu0 0
    %601 = vmatpush1.bf16.msra.mxu0 %v577
    %602 = vmatprep.subr.bf16.mxu0 0
    %603 = vmatpush1.bf16.msra.mxu0 0
    %604 = vmatprep.subr.bf16.mxu0 0
    %605 = vmatpush1.bf16.msra.mxu0 0
    %606 = vmatprep.subr.bf16.mxu0 0
    %607 = vmatpush1.bf16.msra.mxu0 0
    %608 = vmatprep.subr.bf16.mxu0 0
    %609 = vmatpush1.bf16.msra.mxu0 0
    %610 = vmatprep.subr.bf16.mxu0 0
    %611 = vmatpush1.bf16.msra.mxu0 0
    %612 = vmatprep.subr.bf16.mxu0 0
    %613 = vmatpush1.bf16.msra.mxu0 0
    %614 = vmatprep.subr.bf16.mxu0 0
    %615 = vmatpush1.bf16.msra.mxu0 0
    %616 = vmatprep.subr.bf16.mxu0 0
    %617 = vmatpush1.bf16.msra.mxu0 0
    %618 = vmatprep.mubr.bf16.mxu0 0
    %619 = vmatmul.mubr.bf16.gmra.mrb[0].mxu0 %v514
    %v620 = vpop.f32.mrb[0].mxu0
    %v621 = vadd.f32 %v536, %v620
    %v622 = vpop.f32.mrb[0].mxu0
    %v623 = vpop.f32.mrb[0].mxu0
    %v624 = vpop.f32.mrb[0].mxu0
    %625 = vdwg.mxu0
    %v626 = vld [vmem:[%s9] sm:$0x1]
    %v627 = vld [vmem:[%s10] sm:$0x1]
    %628 = vadd.xlane.f32.xlu0 %v621
    %v629 = vpop.xlane.xlu0 %628
    %v630 = vmul.f32 %v621, %v621
    %631 = vadd.xlane.f32.xlu0 %v630
    %v632 = vpop.xlane.xlu0 %631
    %v633 = vmul.f32 %v629, 0.015625
    %v634 = vmul.f32 %v632, 0.015625
    %v635 = vmul.f32 %v633, %v633
    %v636 = vsub.f32 %v634, %v635
    %v637 = vsub.f32 %v621, %v633
    %v638 = vadd.f32 %v636, 1e-05
    %v639 = vrsqrt.pop %v638
    %v640 = vmul.f32 %v637, %v639
    %v642 = vlaneseq
    %v643 = vshrl.u32 %v642, 7
    %v644 = vsub.s32 0, %v643
    %v645 = vrot.slane %v626, %v644
    %v647 = vmul.f32 %v640, %v645
    %v649 = vlaneseq
    %v650 = vshrl.u32 %v649, 7
    %v651 = vsub.s32 0, %v650
    %v652 = vrot.slane %v627, %v651
    %v654 = vadd.f32 %v647, %v652
    %v655 = vmax.f32 %v654, 0.0
    %v656 = vpack.c.bf16 %v655, %v655
    %v657 = vld [vmem:[#allocation10] sm:$0xf]
    %v658 = vld [vmem:[#allocation10 + $0x4] sm:$0xf]
    %v659 = vld [vmem:[#allocation10 + $0x8] sm:$0xf]
    %v660 = vld [vmem:[#allocation10 + $0xc] sm:$0xf]
    %v661 = vld [vmem:[#allocation10 + $0x10] sm:$0xf]
    %v662 = vld [vmem:[#allocation10 + $0x14] sm:$0xf]
    %v663 = vld [vmem:[#allocation10 + $0x18] sm:$0xf]
    %v664 = vld [vmem:[#allocation10 + $0x1c] sm:$0xf]
    %v665 = vld [vmem:[#allocation10 + $0x20] sm:$0xf]
    %v666 = vld [vmem:[#allocation10 + $0x24] sm:$0xf]
    %v667 = vld [vmem:[#allocation10 + $0x28] sm:$0xf]
    %v668 = vld [vmem:[#allocation10 + $0x2c] sm:$0xf]
    %v669 = vld [vmem:[#allocation10 + $0x30] sm:$0xf]
    %v670 = vld [vmem:[#allocation10 + $0x34] sm:$0xf]
    %v671 = vld [vmem:[#allocation10 + $0x38] sm:$0xf]
    %v672 = vld [vmem:[#allocation10 + $0x3c] sm:$0xf]
    %v673 = vld [vmem:[%s12] sm:$0x1]
    %v675 = vlaneseq
    %v676 = vshrl.u32 %v675, 7
    %v677 = vsub.s32 0, %v676
    %v678 = vrot.slane %v673, %v677
    %v696 = vunpack.c.l.b16 %v657
    %v697 = vunpack.c.l.b16 %v658
    %v698 = vunpack.c.l.b16 %v659
    %v699 = vunpack.c.l.b16 %v660
    %v700 = vunpack.c.l.b16 %v661
    %v701 = vunpack.c.l.b16 %v662
    %v702 = vunpack.c.l.b16 %v663
    %v703 = vunpack.c.l.b16 %v664
    %v704 = vunpack.c.l.b16 %v665
    %v705 = vunpack.c.l.b16 %v666
    %v706 = vunpack.c.l.b16 %v667
    %v707 = vunpack.c.l.b16 %v668
    %v708 = vunpack.c.l.b16 %v669
    %v709 = vunpack.c.l.b16 %v670
    %v710 = vunpack.c.l.b16 %v671
    %v711 = vunpack.c.l.b16 %v672
    %v712 = vpack.c.b16 %v697, %v696
    %v713 = vpack.c.b16 %v699, %v698
    %v714 = vpack.c.b16 %v701, %v700
    %v715 = vpack.c.b16 %v703, %v702
    %v716 = vpack.c.b16 %v705, %v704
    %v717 = vpack.c.b16 %v707, %v706
    %v718 = vpack.c.b16 %v709, %v708
    %v719 = vpack.c.b16 %v711, %v710
    %728 = vmatprep.subr.bf16.mxu0 0
    %729 = vmatpush1.bf16.msra.mxu0 %v712
    %730 = vmatprep.subr.bf16.mxu0 0
    %731 = vmatpush1.bf16.msra.mxu0 %v713
    %732 = vmatprep.subr.bf16.mxu0 0
    %733 = vmatpush1.bf16.msra.mxu0 %v714
    %734 = vmatprep.subr.bf16.mxu0 0
    %735 = vmatpush1.bf16.msra.mxu0 %v715
    %736 = vmatprep.subr.bf16.mxu0 0
    %737 = vmatpush1.bf16.msra.mxu0 %v716
    %738 = vmatprep.subr.bf16.mxu0 0
    %739 = vmatpush1.bf16.msra.mxu0 %v717
    %740 = vmatprep.subr.bf16.mxu0 0
    %741 = vmatpush1.bf16.msra.mxu0 %v718
    %742 = vmatprep.subr.bf16.mxu0 0
    %743 = vmatpush1.bf16.msra.mxu0 %v719
    %744 = vmatprep.subr.bf16.mxu0 0
    %745 = vmatpush1.bf16.msra.mxu0 0
    %746 = vmatprep.subr.bf16.mxu0 0
    %747 = vmatpush1.bf16.msra.mxu0 0
    %748 = vmatprep.subr.bf16.mxu0 0
    %749 = vmatpush1.bf16.msra.mxu0 0
    %750 = vmatprep.subr.bf16.mxu0 0
    %751 = vmatpush1.bf16.msra.mxu0 0
    %752 = vmatprep.subr.bf16.mxu0 0
    %753 = vmatpush1.bf16.msra.mxu0 0
    %754 = vmatprep.subr.bf16.mxu0 0
    %755 = vmatpush1.bf16.msra.mxu0 0
    %756 = vmatprep.subr.bf16.mxu0 0
    %757 = vmatpush1.bf16.msra.mxu0 0
    %758 = vmatprep.subr.bf16.mxu0 0
    %759 = vmatpush1.bf16.msra.mxu0 0
    %760 = vmatprep.mubr.bf16.mxu0 0
    %761 = vmatmul.mubr.bf16.gmra.mrb[0].mxu0 %v656
    %v762 = vpop.f32.mrb[0].mxu0
    %v763 = vadd.f32 %v678, %v762
    %v764 = vpop.f32.mrb[0].mxu0
    %v765 = vpop.f32.mrb[0].mxu0
    %v766 = vpop.f32.mrb[0].mxu0
    %767 = vdwg.mxu0
    %768 = vst [vmem:[#allocation11] sm:$0xff] %v763
    // Predicated region
    $region74: #{tpu_custom_call.1} parent=1 // pred_check
      _
    $region75: #{tpu_custom_call.1} parent=1 // pred_check_branch
      %770 = sbr.rel (0) target = $region77
    $region76: #{tpu_custom_call.1} parent=1 // pred_region
      %s772 = ssub.s32 128, 128
      %773 = vsyncadd [#allocation4], %s772
      %s775 = sshll.u32 [#allocation11], 4
      %s776 = int_to_ptr.vmem [resolvable:$true] %s775
      %778 = dma.vmem_to_hbm [thread:$0]  %s776, 128, %s13, [#allocation4]
    $region77: #{tpu_custom_call.1} parent=1 // pred_fallthru
      _
    // Predicated region
    $region78: #{tpu_custom_call.1} parent=1 // pred_check
      _
    $region79: #{tpu_custom_call.1} parent=1 // pred_check_branch
      %780 = sbr.rel (0) target = $region81
    $region80: #{tpu_custom_call.1} parent=1 // pred_region
      %781 = dma.done [#allocation4], 128
    $region81: #{tpu_custom_call.1} parent=1 // pred_fallthru
      _
    %782 = vsyncpa [#allocation3], 1
    %783 = vsyncpa [#allocation6], 1
    %784 = vsyncpa [#allocation9], 1
    %785 = vsyncpa [#allocation4], 1

</llo_original>
